<compile_context>
chip_gen: v7x
topology: tpu7x:2x2x1
jax: 0.10.0
libtpu: 0.0.40
codegen_flags: <defaults>
</compile_context>

<pallas_src>
import functools

import jax
import jax.numpy as jnp
from jax.experimental import pallas as pl
from jax.experimental.pallas import tpu as pltpu

# ---------------- module hyper-parameters (synthetic, deterministic) ----------
VOCAB = 32               # n_words in the pretrained embed table
EMBED_DIM = 32           # n_embed
NUM_TOKENS_IN_TRN = 24   # second_channel.num_embeddings (smaller -> ext_mask hits)
UNK_IDX = 1
BATCH = 2
SEQ = 8

_LANE = 128
_SUBLANE = 8


def _cdiv(a: int, b: int) -> int:
    return -(-a // b)


def _round_up(x: int, m: int) -> int:
    return _cdiv(x, m) * m


def _choose_row_tiling(n_rows: int, row_tile: int):
    """Pick (tile_n, padded_rows): tile_n % 8 == 0, tile_n | padded_rows, and at least
    2 grid steps whenever there are >= 2 sublane-rows of work (v7x megacore sharding)."""
    np8 = _round_up(max(n_rows, 1), _SUBLANE)
    n_tiles = _cdiv(np8, max(row_tile, _SUBLANE))
    if np8 >= 2 * _SUBLANE:
        n_tiles = max(n_tiles, 2)          # both v7x TensorCores get rows
    tile_n = _round_up(_cdiv(np8, n_tiles), _SUBLANE)
    return tile_n, n_tiles * tile_n


def _w2v_kernel(ids_ref, table_ref, out_ref, *, v_main, v_second, unk_idx):
    """Fused two-channel embedding lookup via a single two-hot MXU matmul.

    ids_ref   : (tile_n, 1)  int32   VMEM   flattened token ids (row tile)
    table_ref : (Vp, D)      float32 VMEM   [embed ; second] fused, zero-padded table
    out_ref   : (tile_n, D)  float32 VMEM   output tile (no lane padding)
    """
    ids = ids_ref[...]                                     # (tile_n, 1) int32
    tile_n = ids.shape[0]
    vp = table_ref.shape[0]
    dt = table_ref.dtype

    # Second-channel index: masked_fill(id >= num_embeddings, unk_idx), then offset by
    # v_main so it addresses the second half of the fused table.
    ext = jnp.where(ids >= v_second, jnp.int32(unk_idx), ids) + jnp.int32(v_main)

    # Two-hot rows: column `id` (main) + column `v_main + ext` (second channel).  The two
    # column ranges are disjoint (id < v_main <= ext), so the sum of two one-hots — built
    # directly in the MXU operand dtype — equals the OR with fewer VPU ops.
    col = jax.lax.broadcasted_iota(jnp.int32, (tile_n, vp), 1)
    one = jnp.ones((), dt)
    zero = jnp.zeros((), dt)
    twohot = jnp.where(col == ids, one, zero) + jnp.where(col == ext, one, zero)

    # One MXU contraction performs gather(main) + gather(second) + add.  HIGHEST precision
    # keeps the gathered f32 weights bit-faithful (two-hot entries are exact 0/1, f32 acc).
    # (A bf16 fast path — bf16 twohot + bf16 table — would double VMEM-resident vocab and
    #  MXU throughput at ~1e-3 weight rounding; not taken here to match the f32 reference.)
    out_ref[...] = jnp.dot(twohot, table_ref[...],
                           preferred_element_type=jnp.float32,
                           precision=jax.lax.Precision.HIGHEST)


@functools.partial(jax.jit,
                   static_argnames=("v_main", "v_second", "unk_idx", "row_tile"))
def _w2v_forward(ids, table, *, v_main, v_second, unk_idx, row_tile):
    """ids (B,T) int, table (Vp, D) f32 fused -> (B, T, D) f32.  Jitted so the id
    flatten/pad and the output slice/reshape fuse around the single pallas_call."""
    B, T = ids.shape
    Vp, D = table.shape
    N = B * T
    tile_n, Np = _choose_row_tiling(N, row_tile)

    ids_flat = ids.reshape(-1).astype(jnp.int32)
    if Np != N:
        # Padded rows use id 0 (computed then sliced off below; never aliased into out).
        ids_flat = jnp.pad(ids_flat, (0, Np - N))
    ids_flat = ids_flat.reshape(Np, 1)

    kernel = functools.partial(_w2v_kernel, v_main=v_main, v_second=v_second,
                               unk_idx=unk_idx)

    # Explicit VMEM budget: single-buffered resident table + double-buffered ids/out
    # tiles + the (tile_n, Vp) two-hot operand, with headroom.  Never below the default
    # scoped limit so small problems are unaffected; raising it matters on v5e (16 MiB
    # default) and v7x (32 MiB default / 64 MiB physical).
    itemsize = 4
    budget = (Vp * D * itemsize                         # table, Buffered(1)
              + 2 * tile_n * (D + 1) * itemsize         # double-buffered out + ids tiles
              + tile_n * Vp * itemsize)                 # two-hot MXU operand
    vmem_limit = max(int(1.5 * budget) + (2 << 20), 32 << 20)

    out = pl.pallas_call(
        kernel,
        out_shape=jax.ShapeDtypeStruct((Np, D), jnp.float32),
        grid=(Np // tile_n,),
        in_specs=[
            # ids row tile
            pl.BlockSpec((tile_n, 1), lambda i: (i, 0)),
            # fused table: constant block index -> VMEM-resident across the grid;
            # single-buffered since it never changes.
            pl.BlockSpec((Vp, D), lambda i: (0, 0), pipeline_mode=pl.Buffered(1)),
        ],
        # Full-extent last dim (== D): no lane padding, no post-kernel column slice.
        out_specs=pl.BlockSpec((tile_n, D), lambda i: (i, 0)),
        compiler_params=pltpu.CompilerParams(
            dimension_semantics=("parallel",),          # shards rows across v7x's TCs
            vmem_limit_bytes=vmem_limit),
    )(ids_flat, table)

    if Np != N:
        out = out[:N]
    return out.reshape(B, T, D)


def make_word2vec_embedding(embed_weight, second_weight, *, unk_idx=UNK_IDX,
                            row_tile=512):
    """Module-init: build the fused padded table ONCE (it is a parameter) and return a
    jitted forward(ids) -> (B, T, D) closure.  Mirrors Word2VecEmbeddingModule.forward
    with second_channel=True, word_dropout=None, cpu=False."""
    V, D = embed_weight.shape
    V2, D2 = second_weight.shape
    assert D == D2, "embed and second_channel must share embedding_dim"

    Vp = _round_up(V + V2, _LANE)
    table_bytes = Vp * D * 4
    if table_bytes > (32 << 20):
        # TODO(synk): switch to the HBM-resident scalar-prefetch gather path for tables
        # that do not fit VMEM (v7x has only 64 MiB physical).
        raise NotImplementedError("fused table too large for the VMEM-resident path")

    table = jnp.zeros((Vp, D), jnp.float32)
    table = table.at[:V, :].set(embed_weight.astype(jnp.float32))
    table = table.at[V:V + V2, :].set(second_weight.astype(jnp.float32))
    table = jax.block_until_ready(table)      # materialize at init, not on first call

    def forward(ids):
        return _w2v_forward(ids, table, v_main=V, v_second=V2, unk_idx=unk_idx,
                            row_tile=row_tile)

    return forward


def reference_forward(ids, embed_weight, second_weight, *, unk_idx=UNK_IDX):
    """Pure-JAX reference mirroring the PyTorch forward exactly."""
    v2 = second_weight.shape[0]
    ext_ids = jnp.where(ids >= v2, unk_idx, ids)
    return (jnp.take(embed_weight, ids, axis=0)
            + jnp.take(second_weight, ext_ids, axis=0))


if __name__ == "__main__":
    key = jax.random.PRNGKey(0)
    k_ids, k_embed, k_second = jax.random.split(key, 3)

    # Token ids — drawn over the *full* vocab so some exceed NUM_TOKENS_IN_TRN and
    # exercise the ext_mask / masked_fill(unk_idx) path.  Must lie in [0, VOCAB).
    ids = jax.random.randint(k_ids, (BATCH, SEQ), 0, VOCAB, dtype=jnp.int32)

    # Pretrained embedding table (deterministic).  The second channel is zero-init in
    # the module (__init__), but here it gets a small random value emulating a trained
    # channel so the ext_mask/unk path is numerically exercised by the check.
    embed_weight = jax.random.normal(k_embed, (VOCAB, EMBED_DIM), dtype=jnp.float32)
    second_weight = 0.1 * jax.random.normal(
        k_second, (NUM_TOKENS_IN_TRN, EMBED_DIM), dtype=jnp.float32)

    forward = make_word2vec_embedding(embed_weight, second_weight, unk_idx=UNK_IDX)
    out = jax.block_until_ready(forward(ids))

    ref = reference_forward(ids, embed_weight, second_weight)
    assert out.shape == (BATCH, SEQ, EMBED_DIM)
    assert jnp.allclose(out, ref, atol=1e-5, rtol=1e-5), "mismatch vs reference"

    print("KERNEL_OK")
</pallas_src>

<mosaic_0001>
module attributes {stable_mosaic.version = 11 : i64} {
  func.func @_w2v_kernel(%arg0: i32, %arg1: memref<8x1xi32, #tpu.memory_space<vmem>>, %arg2: memref<128x32xf32, #tpu.memory_space<vmem>>, %arg3: memref<8x32xf32, #tpu.memory_space<vmem>>) attributes {dimension_semantics = [#tpu.dimension_semantics<parallel>], iteration_bounds = array<i64: 2>, scalar_prefetch = 0 : i64, scratch_operands = 0 : i64, tpu.core_type = #tpu.core_type<tc>, window_params = [{transform_indices = @transform_0, window_bounds = array<i64: 8, 1>}, {pipeline_mode = #tpu.pipeline_mode<synchronous>, transform_indices = @transform_1, window_bounds = array<i64: 128, 32>}, {transform_indices = @transform_2, window_bounds = array<i64: 8, 32>}]} {
    %c0 = arith.constant 0 : index
    %c0_0 = arith.constant 0 : index
    %0 = vector.load %arg1[%c0, %c0_0] : memref<8x1xi32, #tpu.memory_space<vmem>>, vector<8x1xi32>
    %c24_i32 = arith.constant 24 : i32
    %1 = vector.broadcast %c24_i32 : i32 to vector<8x1xi32>
    %2 = arith.cmpi sge, %0, %1 : vector<8x1xi32>
    %c1_i32 = arith.constant 1 : i32
    %3 = vector.broadcast %c1_i32 : i32 to vector<8x1xi32>
    %4 = arith.select %2, %3, %0 : vector<8x1xi1>, vector<8x1xi32>
    %c32_i32 = arith.constant 32 : i32
    %5 = vector.broadcast %c32_i32 : i32 to vector<8x1xi32>
    %6 = arith.addi %4, %5 : vector<8x1xi32>
    %7 = tpu.iota {dimensions = array<i32: 1>} : vector<8x128xi32>
    %8 = vector.broadcast %0 : vector<8x1xi32> to vector<8x128xi32>
    %9 = arith.cmpi eq, %7, %8 : vector<8x128xi32>
    %cst = arith.constant 1.000000e+00 : f32
    %cst_1 = arith.constant 0.000000e+00 : f32
    %10 = vector.broadcast %cst : f32 to vector<8x128xf32>
    %11 = vector.broadcast %cst_1 : f32 to vector<8x128xf32>
    %12 = arith.select %9, %10, %11 : vector<8x128xi1>, vector<8x128xf32>
    %13 = vector.broadcast %6 : vector<8x1xi32> to vector<8x128xi32>
    %14 = arith.cmpi eq, %7, %13 : vector<8x128xi32>
    %cst_2 = arith.constant 1.000000e+00 : f32
    %cst_3 = arith.constant 0.000000e+00 : f32
    %15 = vector.broadcast %cst_2 : f32 to vector<8x128xf32>
    %16 = vector.broadcast %cst_3 : f32 to vector<8x128xf32>
    %17 = arith.select %14, %15, %16 : vector<8x128xi1>, vector<8x128xf32>
    %18 = arith.addf %12, %17 : vector<8x128xf32>
    %c0_4 = arith.constant 0 : index
    %c0_5 = arith.constant 0 : index
    %19 = vector.load %arg2[%c0_4, %c0_5] : memref<128x32xf32, #tpu.memory_space<vmem>>, vector<128x32xf32>
    %cst_6 = arith.constant dense<0.000000e+00> : vector<8x32xf32>
    %20 = tpu.matmul %18, %19, %cst_6 {dimension_numbers = #tpu.dot_dimension_numbers<[1], [0], [0], [1], [0, 0, 1, 1], [], []>, precision = #tpu.contract_precision<fp32>} : vector<8x128xf32>, vector<128x32xf32>, vector<8x32xf32> -> vector<8x32xf32>
    %c0_7 = arith.constant 0 : index
    %c0_8 = arith.constant 0 : index
    %21 = vector.load %arg3[%c0_7, %c0_8] : memref<8x32xf32, #tpu.memory_space<vmem>>, vector<8x32xf32>
    tpu.vector_store %arg3[%c0_7, %c0_8], %20 {strides = array<i32>} : memref<8x32xf32, #tpu.memory_space<vmem>>, vector<8x32xf32>,
    return
  }
  func.func @transform_0(%arg0: i32) -> (i32, i32) {
    %c0_i32 = arith.constant 0 : i32
    %c0_i32_0 = arith.constant 0 : i32
    return %arg0, %c0_i32 : i32, i32
  }
  func.func @transform_1(%arg0: i32) -> (i32, i32) {
    %c0_i32 = arith.constant 0 : i32
    %c0_i32_0 = arith.constant 0 : i32
    %c0_i32_1 = arith.constant 0 : i32
    return %c0_i32, %c0_i32_0 : i32, i32
  }
  func.func @transform_2(%arg0: i32) -> (i32, i32) {
    %c0_i32 = arith.constant 0 : i32
    %c0_i32_0 = arith.constant 0 : i32
    return %arg0, %c0_i32 : i32, i32
  }
}

</mosaic_0001>

<llo_original>
// kernel: _w2v_forward.1
$region0: #{_w2v_forward.1}
  #allocation0 [shape = 'u32[]', space=smem, size = 0x4, offset = 0x4, fixed_abs, tag = 'smem constant byte address 0x4 - core index']
  #allocation1 [shape = 'u32[144,128]{1,0:T(1,128)}', space=vmem, size = 0x12000, scoped, tag = 'internal scratch']
  %s0 = inlined_call_operand.vmem [shape: s32[16,1], index: 0, kind: input, shape index: {}]
  %s1 = inlined_call_operand.vmem [shape: f32[128,32], index: 1, kind: input, shape index: {}]
  %s2 = inlined_call_operand.hbm [shape: f32[16,32], index: 2, kind: output, shape index: {}]
  %s3 = sld [smem:[#allocation0]]
  $region41: #{_w2v_forward.1} parent=0
    _
  %s5 = ssub.s32 1, %s3
  %s6 = scalar_select 0, %s5, %s3
  $region1: #{_w2v_forward.1} parent=0
    #allocation2 [shape = 'u8[8192]{0}', space=vmem, size = 0x2000, scoped, tag = 'output window, operand 0']
    #allocation3 [shape = 's32[2]{0}', space=sflag, size = 0x8, scoped, tag = 'scoped memory for _w2v_forward.1']
    %7 = vsyncpa [#allocation3], 0
    %s8 = scalar_lea.sflag [#allocation3], 1
    %9 = vsyncpa %s8, 0
    loop: start=0, step=1, limit=4
    $region2: #{_w2v_forward.1} parent=1 // loop_pre_header
      _
    $region3: #{_w2v_forward.1} parent=1 // loop_header
      %s11 = sphi 0, %s15
      %p12 = scmp.ge.s32.totalorder %s11, 4
      %s21 = sphi 0, %s23
      %s24 = sphi 0, %s21
      %s25 = sphi 0, %s24
      %s41 = sphi 0, %s25
      %s45 = sphi 0, %s45
      %s47 = sphi 0, %s45
      %s48 = sphi 0, %s47
      %s62 = sphi 0, %s48
      %s68 = sphi 0, %s70
      %s71 = sphi 0, %s68
      %s72 = sphi 0, %s71
      %s88 = sphi 0, %s72
    $region4: #{_w2v_forward.1} parent=1 // loop_header_branch
      %14 = sbr.rel (%p12) target = $region8
    $region5: #{_w2v_forward.1} parent=1 // loop_body
      %s16 = ssub.s32 %s11, 1
      %s17 = ssub.s32 %s11, 2
      %s18 = sadd.s32 %s11, 1
      %s19 = ssub.s32 %s11, %s18
      %p20 = scmp.eq.s32.totalorder %s19, 0
      %s22 = sadd.s32 %s21, 1
      %s23 = scalar_select %p20, %s21, %s22
      %p26 = pneg %p20
      %p27 = scmp.eq.s32.totalorder %s11, 1
      %p28 = por %p26, %p27
      %p29 = scmp.ne.s32.totalorder %s21, %s24
      %p30 = scmp.eq.s32.totalorder %s11, 0
      %p31 = por %p29, %p30
      %p32 = scmp.ne.s32.totalorder %s21, %s24
      %p33 = scmp.eq.s32.totalorder %s16, 1
      %p34 = por %p32, %p33
      %p35 = scmp.ne.s32.totalorder %s24, %s25
      %p36 = scmp.eq.s32.totalorder %s16, 0
      %p37 = por %p35, %p36
      %p38 = scmp.ne.s32.totalorder %s24, %s25
      %p39 = scmp.eq.s32.totalorder %s17, 1
      %p40 = por %p38, %p39
      %p42 = scmp.ne.s32.totalorder %s25, %s41
      %p43 = scmp.eq.s32.totalorder %s17, 0
      %p44 = por %p42, %p43
      %s46 = sadd.s32 %s45, 1
      %p49 = scmp.eq.s32.totalorder %s11, 1
      %p50 = scmp.ne.s32.totalorder %s45, %s47
      %p51 = scmp.eq.s32.totalorder %s11, 0
      %p52 = por %p50, %p51
      %p53 = scmp.ne.s32.totalorder %s45, %s47
      %p54 = scmp.eq.s32.totalorder %s16, 1
      %p55 = por %p53, %p54
      %p56 = scmp.ne.s32.totalorder %s47, %s48
      %p57 = scmp.eq.s32.totalorder %s16, 0
      %p58 = por %p56, %p57
      %p59 = scmp.ne.s32.totalorder %s47, %s48
      %p60 = scmp.eq.s32.totalorder %s17, 1
      %p61 = por %p59, %p60
      %p63 = scmp.ne.s32.totalorder %s48, %s62
      %p64 = scmp.eq.s32.totalorder %s17, 0
      %p65 = por %p63, %p64
      %s66 = ssub.s32 %s11, %s18
      %p67 = scmp.eq.s32.totalorder %s66, 0
      %s69 = sadd.s32 %s68, 1
      %s70 = scalar_select %p67, %s68, %s69
      %p73 = pneg %p67
      %p74 = scmp.eq.s32.totalorder %s11, 1
      %p75 = por %p73, %p74
      %p76 = scmp.ne.s32.totalorder %s68, %s71
      %p77 = scmp.eq.s32.totalorder %s11, 0
      %p78 = por %p76, %p77
      %p79 = scmp.ne.s32.totalorder %s68, %s71
      %p80 = scmp.eq.s32.totalorder %s16, 1
      %p81 = por %p79, %p80
      %p82 = scmp.ne.s32.totalorder %s71, %s72
      %p83 = scmp.eq.s32.totalorder %s16, 0
      %p84 = por %p82, %p83
      %p85 = scmp.ne.s32.totalorder %s71, %s72
      %p86 = scmp.eq.s32.totalorder %s17, 1
      %p87 = por %p85, %p86
      %p89 = scmp.ne.s32.totalorder %s72, %s88
      %p90 = scmp.eq.s32.totalorder %s17, 0
      %p91 = por %p89, %p90
      %p92 = scmp.le.s32.totalorder 1, %s11
      %p93 = scmp.lt.s32.totalorder %s11, 3
      %p94 = pnand %p92, %p93
      %p95 = pneg %p94
      // Predicated region
      $region9: #{_w2v_forward.1} parent=5 // pred_check
        _
      $region10: #{_w2v_forward.1} parent=5 // pred_check_branch
        %97 = sbr.rel (%p94) target = $region12
      $region11: #{_w2v_forward.1} parent=5 // pred_region
        %s98 = ssub.s32 %s11, 1
        // Predicated region
        $region13: #{_w2v_forward.1} parent=11 // pred_check
          %p99 = pneg %p58
        $region14: #{_w2v_forward.1} parent=11 // pred_check_branch
          %101 = sbr.rel (%p99) target = $region16
        $region15: #{_w2v_forward.1} parent=11 // pred_region
          _
        $region16: #{_w2v_forward.1} parent=11 // pred_fallthru
          _
      $region12: #{_w2v_forward.1} parent=5 // pred_fallthru
        _
      %p102 = scmp.lt.s32.totalorder %s11, 2
      // Predicated region
      $region17: #{_w2v_forward.1} parent=5 // pred_check
        %p103 = pneg %p102
      $region18: #{_w2v_forward.1} parent=5 // pred_check_branch
        %105 = sbr.rel (%p103) target = $region20
      $region19: #{_w2v_forward.1} parent=5 // pred_region
        // Predicated region
        $region21: #{_w2v_forward.1} parent=19 // pred_check
          %p106 = pneg %p31
        $region22: #{_w2v_forward.1} parent=19 // pred_check_branch
          %108 = sbr.rel (%p106) target = $region24
        $region23: #{_w2v_forward.1} parent=19 // pred_region
          %p109 = scmp.lt.s32.totalorder %s11, 1
          %s110 = scalar_select %p109, %s11, 1
          %s111 = smul.addr %s110, 8
          %s112 = scalar_lea.vmem %s0, %s111
        $region24: #{_w2v_forward.1} parent=19 // pred_fallthru
          _
      $region20: #{_w2v_forward.1} parent=5 // pred_fallthru
        _
      %p113 = scmp.le.s32.totalorder 1, %s11
      %p114 = scmp.lt.s32.totalorder %s11, 3
      %p115 = pnand %p113, %p114
      %p116 = pneg %p115
      // Predicated region
      $region25: #{_w2v_forward.1} parent=5 // pred_check
        _
      $region26: #{_w2v_forward.1} parent=5 // pred_check_branch
        %118 = sbr.rel (%p115) target = $region28
      $region27: #{_w2v_forward.1} parent=5 // pred_region
        %s119 = ssub.s32 %s11, 1
        %p120 = scmp.lt.s32.totalorder %s16, 1
        %s121 = scalar_select %p120, %s16, 1
        %s122 = smul.addr %s121, 8
        %s123 = scalar_lea.vmem %s0, %s122
        %p124 = pneg %p37
        %p125 = pneg %p34
        %p126 = pneg %p58
        %p127 = pneg %p55
        %p128 = pneg %p84
        %p129 = pneg %p81
        %s130 = sand.u32 %s71, 1
        %s131 = scalar_lea.sflag [#allocation3], %s130
        %s132 = sand.u32 %s71, 1
        %s133 = smul.addr %s132, 8
        %s134 = scalar_lea.vmem [#allocation2], %s133
        %p135 = scmp.lt.s32.totalorder %s16, 1
        %s136 = scalar_select %p135, %s16, 1
        %s137 = smul.addr %s136, 8
        %s138 = scalar_lea.vmem %s0, %s137
        %v139 = vld [vmem:[%s138] sm:$0xff]
        %vm140 = vcmp.ge.s32.totalorder %v139, 24
        %v141 = vsel %vm140, 1, %v139
        %v142 = vadd.s32 %v141, 32
        %v143 = vlaneseq
        %v144 = vand.u32 %v143, 127
        %145 = vset.pattern.permute.xlu0 0
        %146 = vperm.xlu0 %145, %v139
        %v147 = vpop.permute.xlu0 %146
        %vm148 = vcmp.eq.s32.totalorder %v144, %v147
        %v149 = vsel %vm148, 1.0, 0.0
        %150 = vset.pattern.permute.xlu0 0
        %151 = vperm.xlu0 %150, %v142
        %v152 = vpop.permute.xlu0 %151
        %vm153 = vcmp.eq.s32.totalorder %v144, %v152
        %v154 = vsel %vm153, 1.0, 0.0
        %v155 = vadd.f32 %v149, %v154
        %v156 = vld [vmem:[%s1] sm:$0xff]
        %v157 = vld [vmem:[%s1 + $0x8] sm:$0xff]
        %v158 = vld [vmem:[%s1 + $0x10] sm:$0xff]
        %v159 = vld [vmem:[%s1 + $0x18] sm:$0xff]
        %v160 = vld [vmem:[%s1 + $0x20] sm:$0xff]
        %v161 = vld [vmem:[%s1 + $0x28] sm:$0xff]
        %v162 = vld [vmem:[%s1 + $0x30] sm:$0xff]
        %v163 = vld [vmem:[%s1 + $0x38] sm:$0xff]
        %v164 = vld [vmem:[%s1 + $0x40] sm:$0xff]
        %v165 = vld [vmem:[%s1 + $0x48] sm:$0xff]
        %v166 = vld [vmem:[%s1 + $0x50] sm:$0xff]
        %v167 = vld [vmem:[%s1 + $0x58] sm:$0xff]
        %v168 = vld [vmem:[%s1 + $0x60] sm:$0xff]
        %v169 = vld [vmem:[%s1 + $0x68] sm:$0xff]
        %v170 = vld [vmem:[%s1 + $0x70] sm:$0xff]
        %v171 = vld [vmem:[%s1 + $0x78] sm:$0xff]
        %172 = vmatprep.subr.mxu0 0.0
        %v173 = vand.u32 %v156, 4294901760
        %174 = vmatpush1.msra.mxu0 %v173
        %175 = vmatprep.subr.mxu0 0.0
        %v176 = vand.u32 %v157, 4294901760
        %177 = vmatpush1.msra.mxu0 %v176
        %178 = vmatprep.subr.mxu0 0.0
        %v179 = vand.u32 %v158, 4294901760
        %180 = vmatpush1.msra.mxu0 %v179
        %181 = vmatprep.subr.mxu0 0.0
        %v182 = vand.u32 %v159, 4294901760
        %183 = vmatpush1.msra.mxu0 %v182
        %184 = vmatprep.subr.mxu0 0.0
        %v185 = vand.u32 %v160, 4294901760
        %186 = vmatpush1.msra.mxu0 %v185
        %187 = vmatprep.subr.mxu0 0.0
        %v188 = vand.u32 %v161, 4294901760
        %189 = vmatpush1.msra.mxu0 %v188
        %190 = vmatprep.subr.mxu0 0.0
        %v191 = vand.u32 %v162, 4294901760
        %192 = vmatpush1.msra.mxu0 %v191
        %193 = vmatprep.subr.mxu0 0.0
        %v194 = vand.u32 %v163, 4294901760
        %195 = vmatpush1.msra.mxu0 %v194
        %196 = vmatprep.subr.mxu0 0.0
        %v197 = vand.u32 %v164, 4294901760
        %198 = vmatpush1.msra.mxu0 %v197
        %199 = vmatprep.subr.mxu0 0.0
        %v200 = vand.u32 %v165, 4294901760
        %201 = vmatpush1.msra.mxu0 %v200
        %202 = vmatprep.subr.mxu0 0.0
        %v203 = vand.u32 %v166, 4294901760
        %204 = vmatpush1.msra.mxu0 %v203
        %205 = vmatprep.subr.mxu0 0.0
        %v206 = vand.u32 %v167, 4294901760
        %207 = vmatpush1.msra.mxu0 %v206
        %208 = vmatprep.subr.mxu0 0.0
        %v209 = vand.u32 %v168, 4294901760
        %210 = vmatpush1.msra.mxu0 %v209
        %211 = vmatprep.subr.mxu0 0.0
        %v212 = vand.u32 %v169, 4294901760
        %213 = vmatpush1.msra.mxu0 %v212
        %214 = vmatprep.subr.mxu0 0.0
        %v215 = vand.u32 %v170, 4294901760
        %216 = vmatpush1.msra.mxu0 %v215
        %217 = vmatprep.subr.mxu0 0.0
        %v218 = vand.u32 %v171, 4294901760
        %219 = vmatpush1.msra.mxu0 %v218
        %220 = vmatprep.subr.mxu0 0.0
        %221 = vmatpush1.msra.mxu0 0.0
        %222 = vmatprep.subr.mxu0 0.0
        %223 = vmatpush1.msra.mxu0 0.0
        %224 = vmatprep.subr.mxu0 0.0
        %225 = vmatpush1.msra.mxu0 0.0
        %226 = vmatprep.subr.mxu0 0.0
        %227 = vmatpush1.msra.mxu0 0.0
        %228 = vmatprep.subr.mxu0 0.0
        %229 = vmatpush1.msra.mxu0 0.0
        %230 = vmatprep.subr.mxu0 0.0
        %231 = vmatpush1.msra.mxu0 0.0
        %232 = vmatprep.subr.mxu0 0.0
        %233 = vmatpush1.msra.mxu0 0.0
        %234 = vmatprep.subr.mxu0 0.0
        %235 = vmatpush1.msra.mxu0 0.0
        %236 = vmatprep.subr.mxu0 0.0
        %237 = vmatpush1.msra.mxu0 0.0
        %238 = vmatprep.subr.mxu0 0.0
        %239 = vmatpush1.msra.mxu0 0.0
        %240 = vmatprep.subr.mxu0 0.0
        %241 = vmatpush1.msra.mxu0 0.0
        %242 = vmatprep.subr.mxu0 0.0
        %243 = vmatpush1.msra.mxu0 0.0
        %244 = vmatprep.subr.mxu0 0.0
        %245 = vmatpush1.msra.mxu0 0.0
        %246 = vmatprep.subr.mxu0 0.0
        %247 = vmatpush1.msra.mxu0 0.0
        %248 = vmatprep.subr.mxu0 0.0
        %249 = vmatpush1.msra.mxu0 0.0
        %250 = vmatprep.subr.mxu0 0.0
        %251 = vmatpush1.msra.mxu0 0.0
        %252 = vmatprep.mubr.f32.mxu0 0.0
        %v253 = vand.u32 %v155, 4294901760
        %v254 = vsub.f32 %v155, %v253
        %v255 = vand.u32 %v254, 4294901760
        %v256 = vsub.f32 %v254, %v255
        %v257 = vand.u32 %v256, 4294901760
        %258 = vmatmul.mubr.f32.gmra.mrb[0].mxu0 %v257
        %v259 = vpop.f32.mrb[0].mxu0
        %v260 = vadd.f32 0.0, %v259
        %v261 = vpop.f32.mrb[0].mxu0
        %262 = vdwg.mxu0
        %263 = vmatprep.subr.mxu0 0.0
        %v264 = vand.u32 %v156, 4294901760
        %v265 = vsub.f32 %v156, %v264
        %v266 = vand.u32 %v265, 4294901760
        %v267 = vsub.f32 %v265, %v266
        %v268 = vand.u32 %v267, 4294901760
        %269 = vmatpush1.msra.mxu0 %v268
        %270 = vmatprep.subr.mxu0 0.0
        %v271 = vand.u32 %v157, 4294901760
        %v272 = vsub.f32 %v157, %v271
        %v273 = vand.u32 %v272, 4294901760
        %v274 = vsub.f32 %v272, %v273
        %v275 = vand.u32 %v274, 4294901760
        %276 = vmatpush1.msra.mxu0 %v275
        %277 = vmatprep.subr.mxu0 0.0
        %v278 = vand.u32 %v158, 4294901760
        %v279 = vsub.f32 %v158, %v278
        %v280 = vand.u32 %v279, 4294901760
        %v281 = vsub.f32 %v279, %v280
        %v282 = vand.u32 %v281, 4294901760
        %283 = vmatpush1.msra.mxu0 %v282
        %284 = vmatprep.subr.mxu0 0.0
        %v285 = vand.u32 %v159, 4294901760
        %v286 = vsub.f32 %v159, %v285
        %v287 = vand.u32 %v286, 4294901760
        %v288 = vsub.f32 %v286, %v287
        %v289 = vand.u32 %v288, 4294901760
        %290 = vmatpush1.msra.mxu0 %v289
        %291 = vmatprep.subr.mxu0 0.0
        %v292 = vand.u32 %v160, 4294901760
        %v293 = vsub.f32 %v160, %v292
        %v294 = vand.u32 %v293, 4294901760
        %v295 = vsub.f32 %v293, %v294
        %v296 = vand.u32 %v295, 4294901760
        %297 = vmatpush1.msra.mxu0 %v296
        %298 = vmatprep.subr.mxu0 0.0
        %v299 = vand.u32 %v161, 4294901760
        %v300 = vsub.f32 %v161, %v299
        %v301 = vand.u32 %v300, 4294901760
        %v302 = vsub.f32 %v300, %v301
        %v303 = vand.u32 %v302, 4294901760
        %304 = vmatpush1.msra.mxu0 %v303
        %305 = vmatprep.subr.mxu0 0.0
        %v306 = vand.u32 %v162, 4294901760
        %v307 = vsub.f32 %v162, %v306
        %v308 = vand.u32 %v307, 4294901760
        %v309 = vsub.f32 %v307, %v308
        %v310 = vand.u32 %v309, 4294901760
        %311 = vmatpush1.msra.mxu0 %v310
        %312 = vmatprep.subr.mxu0 0.0
        %v313 = vand.u32 %v163, 4294901760
        %v314 = vsub.f32 %v163, %v313
        %v315 = vand.u32 %v314, 4294901760
        %v316 = vsub.f32 %v314, %v315
        %v317 = vand.u32 %v316, 4294901760
        %318 = vmatpush1.msra.mxu0 %v317
        %319 = vmatprep.subr.mxu0 0.0
        %v320 = vand.u32 %v164, 4294901760
        %v321 = vsub.f32 %v164, %v320
        %v322 = vand.u32 %v321, 4294901760
        %v323 = vsub.f32 %v321, %v322
        %v324 = vand.u32 %v323, 4294901760
        %325 = vmatpush1.msra.mxu0 %v324
        %326 = vmatprep.subr.mxu0 0.0
        %v327 = vand.u32 %v165, 4294901760
        %v328 = vsub.f32 %v165, %v327
        %v329 = vand.u32 %v328, 4294901760
        %v330 = vsub.f32 %v328, %v329
        %v331 = vand.u32 %v330, 4294901760
        %332 = vmatpush1.msra.mxu0 %v331
        %333 = vmatprep.subr.mxu0 0.0
        %v334 = vand.u32 %v166, 4294901760
        %v335 = vsub.f32 %v166, %v334
        %v336 = vand.u32 %v335, 4294901760
        %v337 = vsub.f32 %v335, %v336
        %v338 = vand.u32 %v337, 4294901760
        %339 = vmatpush1.msra.mxu0 %v338
        %340 = vmatprep.subr.mxu0 0.0
        %v341 = vand.u32 %v167, 4294901760
        %v342 = vsub.f32 %v167, %v341
        %v343 = vand.u32 %v342, 4294901760
        %v344 = vsub.f32 %v342, %v343
        %v345 = vand.u32 %v344, 4294901760
        %346 = vmatpush1.msra.mxu0 %v345
        %347 = vmatprep.subr.mxu0 0.0
        %v348 = vand.u32 %v168, 4294901760
        %v349 = vsub.f32 %v168, %v348
        %v350 = vand.u32 %v349, 4294901760
        %v351 = vsub.f32 %v349, %v350
        %v352 = vand.u32 %v351, 4294901760
        %353 = vmatpush1.msra.mxu0 %v352
        %354 = vmatprep.subr.mxu0 0.0
        %v355 = vand.u32 %v169, 4294901760
        %v356 = vsub.f32 %v169, %v355
        %v357 = vand.u32 %v356, 4294901760
        %v358 = vsub.f32 %v356, %v357
        %v359 = vand.u32 %v358, 4294901760
        %360 = vmatpush1.msra.mxu0 %v359
        %361 = vmatprep.subr.mxu0 0.0
        %v362 = vand.u32 %v170, 4294901760
        %v363 = vsub.f32 %v170, %v362
        %v364 = vand.u32 %v363, 4294901760
        %v365 = vsub.f32 %v363, %v364
        %v366 = vand.u32 %v365, 4294901760
        %367 = vmatpush1.msra.mxu0 %v366
        %368 = vmatprep.subr.mxu0 0.0
        %v369 = vand.u32 %v171, 4294901760
        %v370 = vsub.f32 %v171, %v369
        %v371 = vand.u32 %v370, 4294901760
        %v372 = vsub.f32 %v370, %v371
        %v373 = vand.u32 %v372, 4294901760
        %374 = vmatpush1.msra.mxu0 %v373
        %375 = vmatprep.subr.mxu0 0.0
        %376 = vmatpush1.msra.mxu0 0.0
        %377 = vmatprep.subr.mxu0 0.0
        %378 = vmatpush1.msra.mxu0 0.0
        %379 = vmatprep.subr.mxu0 0.0
        %380 = vmatpush1.msra.mxu0 0.0
        %381 = vmatprep.subr.mxu0 0.0
        %382 = vmatpush1.msra.mxu0 0.0
        %383 = vmatprep.subr.mxu0 0.0
        %384 = vmatpush1.msra.mxu0 0.0
        %385 = vmatprep.subr.mxu0 0.0
        %386 = vmatpush1.msra.mxu0 0.0
        %387 = vmatprep.subr.mxu0 0.0
        %388 = vmatpush1.msra.mxu0 0.0
        %389 = vmatprep.subr.mxu0 0.0
        %390 = vmatpush1.msra.mxu0 0.0
        %391 = vmatprep.subr.mxu0 0.0
        %392 = vmatpush1.msra.mxu0 0.0
        %393 = vmatprep.subr.mxu0 0.0
        %394 = vmatpush1.msra.mxu0 0.0
        %395 = vmatprep.subr.mxu0 0.0
        %396 = vmatpush1.msra.mxu0 0.0
        %397 = vmatprep.subr.mxu0 0.0
        %398 = vmatpush1.msra.mxu0 0.0
        %399 = vmatprep.subr.mxu0 0.0
        %400 = vmatpush1.msra.mxu0 0.0
        %401 = vmatprep.subr.mxu0 0.0
        %402 = vmatpush1.msra.mxu0 0.0
        %403 = vmatprep.subr.mxu0 0.0
        %404 = vmatpush1.msra.mxu0 0.0
        %405 = vmatprep.subr.mxu0 0.0
        %406 = vmatpush1.msra.mxu0 0.0
        %407 = vmatprep.mubr.f32.mxu0 0.0
        %v408 = vand.u32 %v155, 4294901760
        %409 = vmatmul.mubr.f32.gmra.mrb[0].mxu0 %v408
        %v410 = vpop.f32.mrb[0].mxu0
        %v411 = vadd.f32 %v260, %v410
        %v412 = vpop.f32.mrb[0].mxu0
        %413 = vdwg.mxu0
        %414 = vmatprep.subr.mxu0 0.0
        %v415 = vand.u32 %v156, 4294901760
        %v416 = vsub.f32 %v156, %v415
        %417 = vmatpush1.msra.mxu0 %v416
        %418 = vmatprep.subr.mxu0 0.0
        %v419 = vand.u32 %v157, 4294901760
        %v420 = vsub.f32 %v157, %v419
        %421 = vmatpush1.msra.mxu0 %v420
        %422 = vmatprep.subr.mxu0 0.0
        %v423 = vand.u32 %v158, 4294901760
        %v424 = vsub.f32 %v158, %v423
        %425 = vmatpush1.msra.mxu0 %v424
        %426 = vmatprep.subr.mxu0 0.0
        %v427 = vand.u32 %v159, 4294901760
        %v428 = vsub.f32 %v159, %v427
        %429 = vmatpush1.msra.mxu0 %v428
        %430 = vmatprep.subr.mxu0 0.0
        %v431 = vand.u32 %v160, 4294901760
        %v432 = vsub.f32 %v160, %v431
        %433 = vmatpush1.msra.mxu0 %v432
        %434 = vmatprep.subr.mxu0 0.0
        %v435 = vand.u32 %v161, 4294901760
        %v436 = vsub.f32 %v161, %v435
        %437 = vmatpush1.msra.mxu0 %v436
        %438 = vmatprep.subr.mxu0 0.0
        %v439 = vand.u32 %v162, 4294901760
        %v440 = vsub.f32 %v162, %v439
        %441 = vmatpush1.msra.mxu0 %v440
        %442 = vmatprep.subr.mxu0 0.0
        %v443 = vand.u32 %v163, 4294901760
        %v444 = vsub.f32 %v163, %v443
        %445 = vmatpush1.msra.mxu0 %v444
        %446 = vmatprep.subr.mxu0 0.0
        %v447 = vand.u32 %v164, 4294901760
        %v448 = vsub.f32 %v164, %v447
        %449 = vmatpush1.msra.mxu0 %v448
        %450 = vmatprep.subr.mxu0 0.0
        %v451 = vand.u32 %v165, 4294901760
        %v452 = vsub.f32 %v165, %v451
        %453 = vmatpush1.msra.mxu0 %v452
        %454 = vmatprep.subr.mxu0 0.0
        %v455 = vand.u32 %v166, 4294901760
        %v456 = vsub.f32 %v166, %v455
        %457 = vmatpush1.msra.mxu0 %v456
        %458 = vmatprep.subr.mxu0 0.0
        %v459 = vand.u32 %v167, 4294901760
        %v460 = vsub.f32 %v167, %v459
        %461 = vmatpush1.msra.mxu0 %v460
        %462 = vmatprep.subr.mxu0 0.0
        %v463 = vand.u32 %v168, 4294901760
        %v464 = vsub.f32 %v168, %v463
        %465 = vmatpush1.msra.mxu0 %v464
        %466 = vmatprep.subr.mxu0 0.0
        %v467 = vand.u32 %v169, 4294901760
        %v468 = vsub.f32 %v169, %v467
        %469 = vmatpush1.msra.mxu0 %v468
        %470 = vmatprep.subr.mxu0 0.0
        %v471 = vand.u32 %v170, 4294901760
        %v472 = vsub.f32 %v170, %v471
        %473 = vmatpush1.msra.mxu0 %v472
        %474 = vmatprep.subr.mxu0 0.0
        %v475 = vand.u32 %v171, 4294901760
        %v476 = vsub.f32 %v171, %v475
        %477 = vmatpush1.msra.mxu0 %v476
        %478 = vmatprep.subr.mxu0 0.0
        %479 = vmatpush1.msra.mxu0 0.0
        %480 = vmatprep.subr.mxu0 0.0
        %481 = vmatpush1.msra.mxu0 0.0
        %482 = vmatprep.subr.mxu0 0.0
        %483 = vmatpush1.msra.mxu0 0.0
        %484 = vmatprep.subr.mxu0 0.0
        %485 = vmatpush1.msra.mxu0 0.0
        %486 = vmatprep.subr.mxu0 0.0
        %487 = vmatpush1.msra.mxu0 0.0
        %488 = vmatprep.subr.mxu0 0.0
        %489 = vmatpush1.msra.mxu0 0.0
        %490 = vmatprep.subr.mxu0 0.0
        %491 = vmatpush1.msra.mxu0 0.0
        %492 = vmatprep.subr.mxu0 0.0
        %493 = vmatpush1.msra.mxu0 0.0
        %494 = vmatprep.subr.mxu0 0.0
        %495 = vmatpush1.msra.mxu0 0.0
        %496 = vmatprep.subr.mxu0 0.0
        %497 = vmatpush1.msra.mxu0 0.0
        %498 = vmatprep.subr.mxu0 0.0
        %499 = vmatpush1.msra.mxu0 0.0
        %500 = vmatprep.subr.mxu0 0.0
        %501 = vmatpush1.msra.mxu0 0.0
        %502 = vmatprep.subr.mxu0 0.0
        %503 = vmatpush1.msra.mxu0 0.0
        %504 = vmatprep.subr.mxu0 0.0
        %505 = vmatpush1.msra.mxu0 0.0
        %506 = vmatprep.subr.mxu0 0.0
        %507 = vmatpush1.msra.mxu0 0.0
        %508 = vmatprep.subr.mxu0 0.0
        %509 = vmatpush1.msra.mxu0 0.0
        %510 = vmatprep.mubr.f32.mxu0 0.0
        %v511 = vand.u32 %v155, 4294901760
        %v512 = vsub.f32 %v155, %v511
        %513 = vmatmul.mubr.f32.gmra.mrb[0].mxu0 %v512
        %v514 = vpop.f32.mrb[0].mxu0
        %v515 = vadd.f32 %v411, %v514
        %v516 = vpop.f32.mrb[0].mxu0
        %517 = vdwg.mxu0
        %518 = vmatprep.subr.mxu0 0.0
        %v519 = vand.u32 %v156, 4294901760
        %520 = vmatpush1.msra.mxu0 %v519
        %521 = vmatprep.subr.mxu0 0.0
        %v522 = vand.u32 %v157, 4294901760
        %523 = vmatpush1.msra.mxu0 %v522
        %524 = vmatprep.subr.mxu0 0.0
        %v525 = vand.u32 %v158, 4294901760
        %526 = vmatpush1.msra.mxu0 %v525
        %527 = vmatprep.subr.mxu0 0.0
        %v528 = vand.u32 %v159, 4294901760
        %529 = vmatpush1.msra.mxu0 %v528
        %530 = vmatprep.subr.mxu0 0.0
        %v531 = vand.u32 %v160, 4294901760
        %532 = vmatpush1.msra.mxu0 %v531
        %533 = vmatprep.subr.mxu0 0.0
        %v534 = vand.u32 %v161, 4294901760
        %535 = vmatpush1.msra.mxu0 %v534
        %536 = vmatprep.subr.mxu0 0.0
        %v537 = vand.u32 %v162, 4294901760
        %538 = vmatpush1.msra.mxu0 %v537
        %539 = vmatprep.subr.mxu0 0.0
        %v540 = vand.u32 %v163, 4294901760
        %541 = vmatpush1.msra.mxu0 %v540
        %542 = vmatprep.subr.mxu0 0.0
        %v543 = vand.u32 %v164, 4294901760
        %544 = vmatpush1.msra.mxu0 %v543
        %545 = vmatprep.subr.mxu0 0.0
        %v546 = vand.u32 %v165, 4294901760
        %547 = vmatpush1.msra.mxu0 %v546
        %548 = vmatprep.subr.mxu0 0.0
        %v549 = vand.u32 %v166, 4294901760
        %550 = vmatpush1.msra.mxu0 %v549
        %551 = vmatprep.subr.mxu0 0.0
        %v552 = vand.u32 %v167, 4294901760
        %553 = vmatpush1.msra.mxu0 %v552
        %554 = vmatprep.subr.mxu0 0.0
        %v555 = vand.u32 %v168, 4294901760
        %556 = vmatpush1.msra.mxu0 %v555
        %557 = vmatprep.subr.mxu0 0.0
        %v558 = vand.u32 %v169, 4294901760
        %559 = vmatpush1.msra.mxu0 %v558
        %560 = vmatprep.subr.mxu0 0.0
        %v561 = vand.u32 %v170, 4294901760
        %562 = vmatpush1.msra.mxu0 %v561
        %563 = vmatprep.subr.mxu0 0.0
        %v564 = vand.u32 %v171, 4294901760
        %565 = vmatpush1.msra.mxu0 %v564
        %566 = vmatprep.subr.mxu0 0.0
        %567 = vmatpush1.msra.mxu0 0.0
        %568 = vmatprep.subr.mxu0 0.0
        %569 = vmatpush1.msra.mxu0 0.0
        %570 = vmatprep.subr.mxu0 0.0
        %571 = vmatpush1.msra.mxu0 0.0
        %572 = vmatprep.subr.mxu0 0.0
        %573 = vmatpush1.msra.mxu0 0.0
        %574 = vmatprep.subr.mxu0 0.0
        %575 = vmatpush1.msra.mxu0 0.0
        %576 = vmatprep.subr.mxu0 0.0
        %577 = vmatpush1.msra.mxu0 0.0
        %578 = vmatprep.subr.mxu0 0.0
        %579 = vmatpush1.msra.mxu0 0.0
        %580 = vmatprep.subr.mxu0 0.0
        %581 = vmatpush1.msra.mxu0 0.0
        %582 = vmatprep.subr.mxu0 0.0
        %583 = vmatpush1.msra.mxu0 0.0
        %584 = vmatprep.subr.mxu0 0.0
        %585 = vmatpush1.msra.mxu0 0.0
        %586 = vmatprep.subr.mxu0 0.0
        %587 = vmatpush1.msra.mxu0 0.0
        %588 = vmatprep.subr.mxu0 0.0
        %589 = vmatpush1.msra.mxu0 0.0
        %590 = vmatprep.subr.mxu0 0.0
        %591 = vmatpush1.msra.mxu0 0.0
        %592 = vmatprep.subr.mxu0 0.0
        %593 = vmatpush1.msra.mxu0 0.0
        %594 = vmatprep.subr.mxu0 0.0
        %595 = vmatpush1.msra.mxu0 0.0
        %596 = vmatprep.subr.mxu0 0.0
        %597 = vmatpush1.msra.mxu0 0.0
        %598 = vmatprep.mubr.f32.mxu0 0.0
        %v599 = vand.u32 %v155, 4294901760
        %v600 = vsub.f32 %v155, %v599
        %v601 = vand.u32 %v600, 4294901760
        %602 = vmatmul.mubr.f32.gmra.mrb[0].mxu0 %v601
        %v603 = vpop.f32.mrb[0].mxu0
        %v604 = vadd.f32 %v515, %v603
        %v605 = vpop.f32.mrb[0].mxu0
        %606 = vdwg.mxu0
        %607 = vmatprep.subr.mxu0 0.0
        %v608 = vand.u32 %v156, 4294901760
        %v609 = vsub.f32 %v156, %v608
        %v610 = vand.u32 %v609, 4294901760
        %611 = vmatpush1.msra.mxu0 %v610
        %612 = vmatprep.subr.mxu0 0.0
        %v613 = vand.u32 %v157, 4294901760
        %v614 = vsub.f32 %v157, %v613
        %v615 = vand.u32 %v614, 4294901760
        %616 = vmatpush1.msra.mxu0 %v615
        %617 = vmatprep.subr.mxu0 0.0
        %v618 = vand.u32 %v158, 4294901760
        %v619 = vsub.f32 %v158, %v618
        %v620 = vand.u32 %v619, 4294901760
        %621 = vmatpush1.msra.mxu0 %v620
        %622 = vmatprep.subr.mxu0 0.0
        %v623 = vand.u32 %v159, 4294901760
        %v624 = vsub.f32 %v159, %v623
        %v625 = vand.u32 %v624, 4294901760
        %626 = vmatpush1.msra.mxu0 %v625
        %627 = vmatprep.subr.mxu0 0.0
        %v628 = vand.u32 %v160, 4294901760
        %v629 = vsub.f32 %v160, %v628
        %v630 = vand.u32 %v629, 4294901760
        %631 = vmatpush1.msra.mxu0 %v630
        %632 = vmatprep.subr.mxu0 0.0
        %v633 = vand.u32 %v161, 4294901760
        %v634 = vsub.f32 %v161, %v633
        %v635 = vand.u32 %v634, 4294901760
        %636 = vmatpush1.msra.mxu0 %v635
        %637 = vmatprep.subr.mxu0 0.0
        %v638 = vand.u32 %v162, 4294901760
        %v639 = vsub.f32 %v162, %v638
        %v640 = vand.u32 %v639, 4294901760
        %641 = vmatpush1.msra.mxu0 %v640
        %642 = vmatprep.subr.mxu0 0.0
        %v643 = vand.u32 %v163, 4294901760
        %v644 = vsub.f32 %v163, %v643
        %v645 = vand.u32 %v644, 4294901760
        %646 = vmatpush1.msra.mxu0 %v645
        %647 = vmatprep.subr.mxu0 0.0
        %v648 = vand.u32 %v164, 4294901760
        %v649 = vsub.f32 %v164, %v648
        %v650 = vand.u32 %v649, 4294901760
        %651 = vmatpush1.msra.mxu0 %v650
        %652 = vmatprep.subr.mxu0 0.0
        %v653 = vand.u32 %v165, 4294901760
        %v654 = vsub.f32 %v165, %v653
        %v655 = vand.u32 %v654, 4294901760
        %656 = vmatpush1.msra.mxu0 %v655
        %657 = vmatprep.subr.mxu0 0.0
        %v658 = vand.u32 %v166, 4294901760
        %v659 = vsub.f32 %v166, %v658
        %v660 = vand.u32 %v659, 4294901760
        %661 = vmatpush1.msra.mxu0 %v660
        %662 = vmatprep.subr.mxu0 0.0
        %v663 = vand.u32 %v167, 4294901760
        %v664 = vsub.f32 %v167, %v663
        %v665 = vand.u32 %v664, 4294901760
        %666 = vmatpush1.msra.mxu0 %v665
        %667 = vmatprep.subr.mxu0 0.0
        %v668 = vand.u32 %v168, 4294901760
        %v669 = vsub.f32 %v168, %v668
        %v670 = vand.u32 %v669, 4294901760
        %671 = vmatpush1.msra.mxu0 %v670
        %672 = vmatprep.subr.mxu0 0.0
        %v673 = vand.u32 %v169, 4294901760
        %v674 = vsub.f32 %v169, %v673
        %v675 = vand.u32 %v674, 4294901760
        %676 = vmatpush1.msra.mxu0 %v675
        %677 = vmatprep.subr.mxu0 0.0
        %v678 = vand.u32 %v170, 4294901760
        %v679 = vsub.f32 %v170, %v678
        %v680 = vand.u32 %v679, 4294901760
        %681 = vmatpush1.msra.mxu0 %v680
        %682 = vmatprep.subr.mxu0 0.0
        %v683 = vand.u32 %v171, 4294901760
        %v684 = vsub.f32 %v171, %v683
        %v685 = vand.u32 %v684, 4294901760
        %686 = vmatpush1.msra.mxu0 %v685
        %687 = vmatprep.subr.mxu0 0.0
        %688 = vmatpush1.msra.mxu0 0.0
        %689 = vmatprep.subr.mxu0 0.0
        %690 = vmatpush1.msra.mxu0 0.0
        %691 = vmatprep.subr.mxu0 0.0
        %692 = vmatpush1.msra.mxu0 0.0
        %693 = vmatprep.subr.mxu0 0.0
        %694 = vmatpush1.msra.mxu0 0.0
        %695 = vmatprep.subr.mxu0 0.0
        %696 = vmatpush1.msra.mxu0 0.0
        %697 = vmatprep.subr.mxu0 0.0
        %698 = vmatpush1.msra.mxu0 0.0
        %699 = vmatprep.subr.mxu0 0.0
        %700 = vmatpush1.msra.mxu0 0.0
        %701 = vmatprep.subr.mxu0 0.0
        %702 = vmatpush1.msra.mxu0 0.0
        %703 = vmatprep.subr.mxu0 0.0
        %704 = vmatpush1.msra.mxu0 0.0
        %705 = vmatprep.subr.mxu0 0.0
        %706 = vmatpush1.msra.mxu0 0.0
        %707 = vmatprep.subr.mxu0 0.0
        %708 = vmatpush1.msra.mxu0 0.0
        %709 = vmatprep.subr.mxu0 0.0
        %710 = vmatpush1.msra.mxu0 0.0
        %711 = vmatprep.subr.mxu0 0.0
        %712 = vmatpush1.msra.mxu0 0.0
        %713 = vmatprep.subr.mxu0 0.0
        %714 = vmatpush1.msra.mxu0 0.0
        %715 = vmatprep.subr.mxu0 0.0
        %716 = vmatpush1.msra.mxu0 0.0
        %717 = vmatprep.subr.mxu0 0.0
        %718 = vmatpush1.msra.mxu0 0.0
        %719 = vmatprep.mubr.f32.mxu0 0.0
        %v720 = vand.u32 %v155, 4294901760
        %721 = vmatmul.mubr.f32.gmra.mrb[0].mxu0 %v720
        %v722 = vpop.f32.mrb[0].mxu0
        %v723 = vadd.f32 %v604, %v722
        %v724 = vpop.f32.mrb[0].mxu0
        %725 = vdwg.mxu0
        %726 = vmatprep.subr.mxu0 0.0
        %v727 = vand.u32 %v156, 4294901760
        %728 = vmatpush1.msra.mxu0 %v727
        %729 = vmatprep.subr.mxu0 0.0
        %v730 = vand.u32 %v157, 4294901760
        %731 = vmatpush1.msra.mxu0 %v730
        %732 = vmatprep.subr.mxu0 0.0
        %v733 = vand.u32 %v158, 4294901760
        %734 = vmatpush1.msra.mxu0 %v733
        %735 = vmatprep.subr.mxu0 0.0
        %v736 = vand.u32 %v159, 4294901760
        %737 = vmatpush1.msra.mxu0 %v736
        %738 = vmatprep.subr.mxu0 0.0
        %v739 = vand.u32 %v160, 4294901760
        %740 = vmatpush1.msra.mxu0 %v739
        %741 = vmatprep.subr.mxu0 0.0
        %v742 = vand.u32 %v161, 4294901760
        %743 = vmatpush1.msra.mxu0 %v742
        %744 = vmatprep.subr.mxu0 0.0
        %v745 = vand.u32 %v162, 4294901760
        %746 = vmatpush1.msra.mxu0 %v745
        %747 = vmatprep.subr.mxu0 0.0
        %v748 = vand.u32 %v163, 4294901760
        %749 = vmatpush1.msra.mxu0 %v748
        %750 = vmatprep.subr.mxu0 0.0
        %v751 = vand.u32 %v164, 4294901760
        %752 = vmatpush1.msra.mxu0 %v751
        %753 = vmatprep.subr.mxu0 0.0
        %v754 = vand.u32 %v165, 4294901760
        %755 = vmatpush1.msra.mxu0 %v754
        %756 = vmatprep.subr.mxu0 0.0
        %v757 = vand.u32 %v166, 4294901760
        %758 = vmatpush1.msra.mxu0 %v757
        %759 = vmatprep.subr.mxu0 0.0
        %v760 = vand.u32 %v167, 4294901760
        %761 = vmatpush1.msra.mxu0 %v760
        %762 = vmatprep.subr.mxu0 0.0
        %v763 = vand.u32 %v168, 4294901760
        %764 = vmatpush1.msra.mxu0 %v763
        %765 = vmatprep.subr.mxu0 0.0
        %v766 = vand.u32 %v169, 4294901760
        %767 = vmatpush1.msra.mxu0 %v766
        %768 = vmatprep.subr.mxu0 0.0
        %v769 = vand.u32 %v170, 4294901760
        %770 = vmatpush1.msra.mxu0 %v769
        %771 = vmatprep.subr.mxu0 0.0
        %v772 = vand.u32 %v171, 4294901760
        %773 = vmatpush1.msra.mxu0 %v772
        %774 = vmatprep.subr.mxu0 0.0
        %775 = vmatpush1.msra.mxu0 0.0
        %776 = vmatprep.subr.mxu0 0.0
        %777 = vmatpush1.msra.mxu0 0.0
        %778 = vmatprep.subr.mxu0 0.0
        %779 = vmatpush1.msra.mxu0 0.0
        %780 = vmatprep.subr.mxu0 0.0
        %781 = vmatpush1.msra.mxu0 0.0
        %782 = vmatprep.subr.mxu0 0.0
        %783 = vmatpush1.msra.mxu0 0.0
        %784 = vmatprep.subr.mxu0 0.0
        %785 = vmatpush1.msra.mxu0 0.0
        %786 = vmatprep.subr.mxu0 0.0
        %787 = vmatpush1.msra.mxu0 0.0
        %788 = vmatprep.subr.mxu0 0.0
        %789 = vmatpush1.msra.mxu0 0.0
        %790 = vmatprep.subr.mxu0 0.0
        %791 = vmatpush1.msra.mxu0 0.0
        %792 = vmatprep.subr.mxu0 0.0
        %793 = vmatpush1.msra.mxu0 0.0
        %794 = vmatprep.subr.mxu0 0.0
        %795 = vmatpush1.msra.mxu0 0.0
        %796 = vmatprep.subr.mxu0 0.0
        %797 = vmatpush1.msra.mxu0 0.0
        %798 = vmatprep.subr.mxu0 0.0
        %799 = vmatpush1.msra.mxu0 0.0
        %800 = vmatprep.subr.mxu0 0.0
        %801 = vmatpush1.msra.mxu0 0.0
        %802 = vmatprep.subr.mxu0 0.0
        %803 = vmatpush1.msra.mxu0 0.0
        %804 = vmatprep.subr.mxu0 0.0
        %805 = vmatpush1.msra.mxu0 0.0
        %806 = vmatprep.mubr.f32.mxu0 0.0
        %v807 = vand.u32 %v155, 4294901760
        %808 = vmatmul.mubr.f32.gmra.mrb[0].mxu0 %v807
        %v809 = vpop.f32.mrb[0].mxu0
        %v810 = vadd.f32 %v723, %v809
        %v811 = vpop.f32.mrb[0].mxu0
        %812 = vdwg.mxu0
        %vm813 = vcmask 261120
        %814 = vst.msk [vmem:[%s134] sm:$0xff] %vm813, %v810
        %s815 = sand.u32 %s71, 1
        %s816 = scalar_lea.sflag [#allocation3], %s815
        %s817 = sand.u32 %s71, 1
        %s818 = smul.addr %s817, 8
        %s819 = scalar_lea.vmem [#allocation2], %s818
        // Predicated region
        $region29: #{_w2v_forward.1} parent=27 // pred_check
          %p820 = pneg %p81
        $region30: #{_w2v_forward.1} parent=27 // pred_check_branch
          %822 = sbr.rel (%p820) target = $region32
        $region31: #{_w2v_forward.1} parent=27 // pred_region
          %s824 = ssub.s32 128, 128
          %825 = vsyncadd %s816, %s824
          %s826 = smul.addr %s16, 128
          %s827 = scalar_lea.hbm %s2, %s826
          %s829 = sshll.u32 %s819, 4
          %s830 = int_to_ptr.vmem [resolvable:$true] %s829
          %832 = dma.vmem_to_hbm [thread:$0]  %s830, 128, %s827, %s816
        $region32: #{_w2v_forward.1} parent=27 // pred_fallthru
          _
      $region28: #{_w2v_forward.1} parent=5 // pred_fallthru
        _
      %p833 = scmp.le.s32.totalorder 2, %s11
      // Predicated region
      $region33: #{_w2v_forward.1} parent=5 // pred_check
        %p834 = pneg %p833
      $region34: #{_w2v_forward.1} parent=5 // pred_check_branch
        %836 = sbr.rel (%p834) target = $region36
      $region35: #{_w2v_forward.1} parent=5 // pred_region
        %s837 = ssub.s32 %s11, 2
        // Predicated region
        $region37: #{_w2v_forward.1} parent=35 // pred_check
          %p838 = pneg %p87
        $region38: #{_w2v_forward.1} parent=35 // pred_check_branch
          %840 = sbr.rel (%p838) target = $region40
        $region39: #{_w2v_forward.1} parent=35 // pred_region
          %s841 = sand.u32 %s72, 1
          %s842 = scalar_lea.sflag [#allocation3], %s841
          %s843 = sand.u32 %s72, 1
          %s844 = smul.addr %s843, 8
          %s845 = scalar_lea.vmem [#allocation2], %s844
          %846 = dma.done %s842, 128
        $region40: #{_w2v_forward.1} parent=35 // pred_fallthru
          _
      $region36: #{_w2v_forward.1} parent=5 // pred_fallthru
        _
    $region6: #{_w2v_forward.1} parent=1 // loop_footer
      %s15 = sadd.s32 1, %s11
    $region7: #{_w2v_forward.1} parent=1 // loop_footer_branch
      %10 = sbr.rel target = $region3
    $region8: #{_w2v_forward.1} parent=1 // loop_exit
      _
    %847 = vsyncpa [#allocation3], 1
    %s848 = scalar_lea.sflag [#allocation3], 1
    %849 = vsyncpa %s848, 1

</llo_original>
